<compile_context>
chip_gen: v5e
topology: v5e:2x2
jax: 0.10.0
libtpu: 0.0.40
codegen_flags: <defaults>
</compile_context>

<pallas_src>
import functools

import jax
import jax.numpy as jnp
from jax.experimental import pallas as pl
from jax.experimental.pallas import tpu as pltpu

# ---- problem sizes (small, consistent with the module) ----------------------
B = 2              # batch
T = 8              # sequence length (== block_size)
N_EMBD = 32        # C
HEAD_SIZE = 8
SCALE = float(HEAD_SIZE) ** 0.5   # reference multiplies (not divides) by sqrt(head_size)

# f32 keeps the 1e-5 match with the f32 reference; jnp.bfloat16 cuts MXU pass count
# on v6e/v7x (softmax/accumulation stay f32 either way).
COMPUTE_DTYPE = jnp.float32


def self_attention_kernel(x_ref, w_qkv_ref, o_ref, *, batch, seq, head_size, scale):
    """Single invocation: the whole problem lives in VMEM.

    x_ref     : (batch*seq, C)        -- batch folded into rows
    w_qkv_ref : (C, 3*head_size)      -- [Wq | Wk | Wv] fused along the output dim
    o_ref     : (batch*seq, head_size)
    """
    x = x_ref[...].astype(COMPUTE_DTYPE)
    w = w_qkv_ref[...].astype(COMPUTE_DTYPE)

    # One fused QKV projection on the MXU, f32 accumulation.
    qkv = jnp.dot(x, w, preferred_element_type=jnp.float32)           # (B*T, 3*hs)

    # Split q/k/v and restore the batch axis (splits land on head_size boundaries).
    q = qkv[:, 0 * head_size:1 * head_size].reshape(batch, seq, head_size)
    k = qkv[:, 1 * head_size:2 * head_size].reshape(batch, seq, head_size)
    v = qkv[:, 2 * head_size:3 * head_size].reshape(batch, seq, head_size)

    # Scores: the reference multiplies by sqrt(head_size). One batched dot_general
    # instead of a per-batch Python loop.
    s = jnp.einsum("btd,bsd->bts", q, k,
                   preferred_element_type=jnp.float32) * scale         # (B, T, T) f32

    # Numerically-stable softmax over the last dim (no causal mask, matching the ref);
    # exact division keeps the 1e-5 match with the f32 reference.
    s = s - jnp.max(s, axis=-1, keepdims=True)
    p = jnp.exp(s)
    p = p / jnp.sum(p, axis=-1, keepdims=True)

    # Attention-weighted values; single flat full-block store.
    out = jnp.einsum("bts,bsd->btd", p, v.astype(p.dtype),
                     preferred_element_type=jnp.float32)                # (B, T, hs)
    o_ref[...] = out.reshape(batch * seq, head_size).astype(o_ref.dtype)


def self_attention(x, w_qkv):
    """x: (B, T, C) f32; w_qkv: (C, 3*head_size) = [Wq | Wk | Wv] in (in, out) layout."""
    batch, seq, c = x.shape
    head_size = w_qkv.shape[1] // 3

    # Fold batch into rows (row-major reshape, free outside the kernel) so the fused
    # QKV projection sees all 16 rows in a single matmul.
    x_rows = x.reshape(batch * seq, c)

    kernel = functools.partial(
        self_attention_kernel, batch=batch, seq=seq, head_size=head_size, scale=SCALE)

    out_rows = pl.pallas_call(
        kernel,
        out_shape=jax.ShapeDtypeStruct((batch * seq, head_size), x.dtype),
        grid_spec=pl.GridSpec(
            grid=(1,),  # single step: per-step pipeline overhead dominates at this size
            in_specs=[
                pl.BlockSpec((batch * seq, c), lambda i: (0, 0)),        # x rows
                pl.BlockSpec((c, 3 * head_size), lambda i: (0, 0)),      # fused W_qkv
            ],
            out_specs=pl.BlockSpec((batch * seq, head_size), lambda i: (0, 0)),
        ),
        compiler_params=pltpu.CompilerParams(
            # Only one grid step, so nothing to shard across TensorCores here; grow a
            # parallel batch axis again if B ever scales (relevant on v7x's 2 TCs).
            dimension_semantics=("arbitrary",),
        ),
    )(x_rows, w_qkv)

    # Free row-major reshape back to the module's (B, T, head_size) output layout.
    return out_rows.reshape(batch, seq, head_size)


def reference_self_attention(x, wq, wk, wv):
    """Pure-JAX reference mirroring the PyTorch forward."""
    q = x @ wq          # (B, T, hs)
    k = x @ wk
    v = x @ wv
    s = jnp.einsum("btd,bsd->bts", q, k) * SCALE
    p = jax.nn.softmax(s, axis=-1)
    return jnp.einsum("bts,bsd->btd", p, v)


if __name__ == "__main__":
    key = jax.random.PRNGKey(0)
    kx, kq, kk, kv = jax.random.split(key, 4)

    x = jax.random.normal(kx, (B, T, N_EMBD), dtype=jnp.float32)

    # PyTorch nn.Linear stores (out, in) and computes x @ W^T; here we directly store
    # the (in, out) matrix used on the right of the matmul -- mathematically identical.
    scale_w = 1.0 / (N_EMBD ** 0.5)
    wq = jax.random.uniform(kq, (N_EMBD, HEAD_SIZE), jnp.float32, -scale_w, scale_w)
    wk = jax.random.uniform(kk, (N_EMBD, HEAD_SIZE), jnp.float32, -scale_w, scale_w)
    wv = jax.random.uniform(kv, (N_EMBD, HEAD_SIZE), jnp.float32, -scale_w, scale_w)
    w_qkv = jnp.concatenate([wq, wk, wv], axis=1)   # (C, 3*hs) fused weight

    out = jax.block_until_ready(self_attention(x, w_qkv))

    ref = reference_self_attention(x, wq, wk, wv)
    assert out.shape == (B, T, HEAD_SIZE), out.shape
    tol = 1e-5 if COMPUTE_DTYPE == jnp.float32 else 2e-2
    assert jnp.allclose(out, ref, atol=tol, rtol=tol), float(jnp.max(jnp.abs(out - ref)))

    print("KERNEL_OK")
</pallas_src>

<mosaic_0001>
module attributes {stable_mosaic.version = 11 : i64} {
  func.func @self_attention_kernel(%arg0: i32, %arg1: memref<16x32xf32, #tpu.memory_space<vmem>>, %arg2: memref<32x24xf32, #tpu.memory_space<vmem>>, %arg3: memref<16x8xf32, #tpu.memory_space<vmem>>) attributes {dimension_semantics = [#tpu.dimension_semantics<arbitrary>], iteration_bounds = array<i64: 1>, scalar_prefetch = 0 : i64, scratch_operands = 0 : i64, tpu.core_type = #tpu.core_type<tc>, window_params = [{pipeline_mode = #tpu.pipeline_mode<synchronous>, transform_indices = @transform_0, window_bounds = array<i64: 16, 32>}, {pipeline_mode = #tpu.pipeline_mode<synchronous>, transform_indices = @transform_1, window_bounds = array<i64: 32, 24>}, {pipeline_mode = #tpu.pipeline_mode<synchronous>, transform_indices = @transform_2, window_bounds = array<i64: 16, 8>}]} {
    %c0 = arith.constant 0 : index
    %c0_0 = arith.constant 0 : index
    %0 = vector.load %arg1[%c0, %c0_0] : memref<16x32xf32, #tpu.memory_space<vmem>>, vector<16x32xf32>
    %c0_1 = arith.constant 0 : index
    %c0_2 = arith.constant 0 : index
    %1 = vector.load %arg2[%c0_1, %c0_2] : memref<32x24xf32, #tpu.memory_space<vmem>>, vector<32x24xf32>
    %cst = arith.constant dense<0.000000e+00> : vector<16x24xf32>
    %2 = tpu.matmul %0, %1, %cst {dimension_numbers = #tpu.dot_dimension_numbers<[1], [0], [0], [1], [0, 0, 1, 1], [], []>} : vector<16x32xf32>, vector<32x24xf32>, vector<16x24xf32> -> vector<16x24xf32>
    %3 = vector.extract_strided_slice %2 {offsets = [0, 0], sizes = [16, 8], strides = [1, 1]} : vector<16x24xf32> to vector<16x8xf32>
    %4 = vector.shape_cast %3 : vector<16x8xf32> to vector<2x8x8xf32>
    %5 = vector.extract_strided_slice %2 {offsets = [0, 8], sizes = [16, 8], strides = [1, 1]} : vector<16x24xf32> to vector<16x8xf32>
    %6 = vector.shape_cast %5 : vector<16x8xf32> to vector<2x8x8xf32>
    %7 = vector.extract_strided_slice %2 {offsets = [0, 16], sizes = [16, 8], strides = [1, 1]} : vector<16x24xf32> to vector<16x8xf32>
    %8 = vector.shape_cast %7 : vector<16x8xf32> to vector<2x8x8xf32>
    "tpu.trace_start"() <{level = 10 : i32, message = "btd,bsd->bts"}> : () -> ()
    %cst_3 = arith.constant dense<0.000000e+00> : vector<2x8x8xf32>
    %9 = tpu.matmul %4, %6, %cst_3 {dimension_numbers = #tpu.dot_dimension_numbers<[2], [2], [1], [1], [0, 0, 0, 1, 1, 1], [0], [0]>} : vector<2x8x8xf32>, vector<2x8x8xf32>, vector<2x8x8xf32> -> vector<2x8x8xf32>
    "tpu.trace_stop"() : () -> ()
    %cst_4 = arith.constant 2.82842708 : f32
    %10 = vector.broadcast %cst_4 : f32 to vector<2x8x8xf32>
    %11 = arith.mulf %9, %10 : vector<2x8x8xf32>
    %cst_5 = arith.constant dense<0xFF800000> : vector<2x8xf32>
    %12 = vector.multi_reduction <maximumf>, %11, %cst_5 [2] : vector<2x8x8xf32> to vector<2x8xf32>
    %13 = vector.shape_cast %12 : vector<2x8xf32> to vector<2x8x1xf32>
    %14 = vector.broadcast %13 : vector<2x8x1xf32> to vector<2x8x8xf32>
    %15 = arith.subf %11, %14 : vector<2x8x8xf32>
    %16 = math.exp %15 : vector<2x8x8xf32>
    %cst_6 = arith.constant dense<0.000000e+00> : vector<2x8xf32>
    %17 = vector.multi_reduction <add>, %16, %cst_6 [2] : vector<2x8x8xf32> to vector<2x8xf32>
    %18 = vector.shape_cast %17 : vector<2x8xf32> to vector<2x8x1xf32>
    %19 = vector.broadcast %18 : vector<2x8x1xf32> to vector<2x8x8xf32>
    %20 = arith.divf %16, %19 : vector<2x8x8xf32>
    "tpu.trace_start"() <{level = 10 : i32, message = "bts,bsd->btd"}> : () -> ()
    %cst_7 = arith.constant dense<0.000000e+00> : vector<2x8x8xf32>
    %21 = tpu.matmul %20, %8, %cst_7 {dimension_numbers = #tpu.dot_dimension_numbers<[2], [1], [1], [2], [0, 0, 0, 1, 1, 2], [0], [0]>} : vector<2x8x8xf32>, vector<2x8x8xf32>, vector<2x8x8xf32> -> vector<2x8x8xf32>
    "tpu.trace_stop"() : () -> ()
    %22 = vector.shape_cast %21 : vector<2x8x8xf32> to vector<16x8xf32>
    %c0_8 = arith.constant 0 : index
    %c0_9 = arith.constant 0 : index
    %23 = vector.load %arg3[%c0_8, %c0_9] : memref<16x8xf32, #tpu.memory_space<vmem>>, vector<16x8xf32>
    tpu.vector_store %arg3[%c0_8, %c0_9], %22 {strides = array<i32>} : memref<16x8xf32, #tpu.memory_space<vmem>>, vector<16x8xf32>,
    return
  }
  func.func @transform_0(%arg0: i32) -> (i32, i32) {
    %c0_i32 = arith.constant 0 : i32
    %c0_i32_0 = arith.constant 0 : i32
    %c0_i32_1 = arith.constant 0 : i32
    return %c0_i32, %c0_i32_0 : i32, i32
  }
  func.func @transform_1(%arg0: i32) -> (i32, i32) {
    %c0_i32 = arith.constant 0 : i32
    %c0_i32_0 = arith.constant 0 : i32
    %c0_i32_1 = arith.constant 0 : i32
    return %c0_i32, %c0_i32_0 : i32, i32
  }
  func.func @transform_2(%arg0: i32) -> (i32, i32) {
    %c0_i32 = arith.constant 0 : i32
    %c0_i32_0 = arith.constant 0 : i32
    %c0_i32_1 = arith.constant 0 : i32
    return %c0_i32, %c0_i32_0 : i32, i32
  }
}

</mosaic_0001>

<llo_original>
// kernel: tpu_custom_call.1
$region0: #{tpu_custom_call.1}
  #allocation0 [shape = 'u32[]', space=smem, size = 0x4, offset = 0x4, fixed_abs, tag = 'smem constant byte address 0x4 - core index']
  #allocation1 [shape = 'u32[72,128]{1,0:T(1,128)}', space=vmem, size = 0x9000, scoped, tag = 'internal scratch']
  %s0 = inlined_call_operand.vmem [shape: f32[16,32], index: 0, kind: input, shape index: {}]
  %s1 = inlined_call_operand.vmem [shape: f32[32,24], index: 1, kind: input, shape index: {}]
  %s2 = inlined_call_operand.vmem [shape: f32[16,8], index: 2, kind: output, shape index: {}]
  %s3 = sld [smem:[#allocation0]]
  $region18: #{tpu_custom_call.1} parent=0
    _
  %s5 = ssub.s32 1, %s3
  %s6 = scalar_select 0, %s5, %s3
  // Predicated region
  $region2: #{tpu_custom_call.1} parent=0 // pred_check
    _
  $region3: #{tpu_custom_call.1} parent=0 // pred_check_branch
    %8 = sbr.rel (0) target = $region5
  $region4: #{tpu_custom_call.1} parent=0 // pred_region
    _
  $region5: #{tpu_custom_call.1} parent=0 // pred_fallthru
    _
  // Predicated region
  $region6: #{tpu_custom_call.1} parent=0 // pred_check
    _
  $region7: #{tpu_custom_call.1} parent=0 // pred_check_branch
    %10 = sbr.rel (0) target = $region9
  $region8: #{tpu_custom_call.1} parent=0 // pred_region
    _
  $region9: #{tpu_custom_call.1} parent=0 // pred_fallthru
    _
  %v11 = vld [vmem:[%s0] sm:$0xff]
  %v12 = vld [vmem:[%s0 + $0x8] sm:$0xff]
  %v13 = vld [vmem:[%s1] sm:$0xff]
  %v14 = vld [vmem:[%s1 + $0x8] sm:$0xff]
  %v15 = vld [vmem:[%s1 + $0x10] sm:$0xff]
  %v16 = vld [vmem:[%s1 + $0x18] sm:$0xff]
  %vm17 = vcmask 261120
  %v19 = vsel %vm17, %v11, 0
  %v22 = vsel %vm17, %v12, 0
  %24 = vmatpush.msra.mxu0 0.0
  %25 = vmatpush.msra.mxu0 0.0
  %26 = vmatpush.msra.mxu0 0.0
  %27 = vmatpush.msra.mxu0 0.0
  %28 = vmatpush.msra.mxu0 0.0
  %29 = vmatpush.msra.mxu0 0.0
  %30 = vmatpush.msra.mxu0 0.0
  %31 = vmatpush.msra.mxu0 0.0
  %32 = vmatpush.msra.mxu0 0.0
  %33 = vmatpush.msra.mxu0 0.0
  %34 = vmatpush.msra.mxu0 0.0
  %35 = vmatpush.msra.mxu0 0.0
  %36 = vmatpush.msra.mxu0 %v16
  %37 = vmatpush.msra.mxu0 %v15
  %38 = vmatpush.msra.mxu0 %v14
  %39 = vmatpush.msra.mxu0 %v13
  %40 = vmatmul.f32.gmra.mxu0 %v19
  %v41 = vpop.f32.mrf.mxu0
  %v42 = vadd.f32 0.0, %v41
  %43 = vmatmul.f32.gmra.mxu0 %v22
  %v44 = vpop.f32.mrf.mxu0
  %v45 = vadd.f32 0.0, %v44
  %46 = vdwg.mxu0
  %48 = vrot.lane.b32.xlu0 %v42, 120
  %v49 = vpop.permute.xlu0 %48
  %vm50 = vcmask 64512
  %v51 = vsel %vm50, %v42, 0
  %v53 = vsel %vm50, %v49, 0
  %55 = vmatpush.xpose.msra.mxu0 0.0
  %56 = vmatpush.xpose.msra.mxu0 0.0
  %57 = vmatpush.xpose.msra.mxu0 0.0
  %58 = vmatpush.xpose.msra.mxu0 0.0
  %59 = vmatpush.xpose.msra.mxu0 0.0
  %60 = vmatpush.xpose.msra.mxu0 0.0
  %61 = vmatpush.xpose.msra.mxu0 0.0
  %62 = vmatpush.xpose.msra.mxu0 0.0
  %63 = vmatpush.xpose.msra.mxu0 0.0
  %64 = vmatpush.xpose.msra.mxu0 0.0
  %65 = vmatpush.xpose.msra.mxu0 0.0
  %66 = vmatpush.xpose.msra.mxu0 0.0
  %67 = vmatpush.xpose.msra.mxu0 0.0
  %68 = vmatpush.xpose.msra.mxu0 0.0
  %69 = vmatpush.xpose.msra.mxu0 0.0
  %70 = vmatpush.xpose.msra.mxu0 %v53
  %71 = vmatmul.f32.gmra.mxu0 %v51
  %v72 = vpop.f32.mrf.mxu0
  %v73 = vadd.f32 0.0, %v72
  %74 = vdwg.mxu0
  %76 = vrot.lane.b32.xlu0 %v45, 120
  %v77 = vpop.permute.xlu0 %76
  %v78 = vsel %vm50, %v45, 0
  %v80 = vsel %vm50, %v77, 0
  %82 = vmatpush.xpose.msra.mxu0 0.0
  %83 = vmatpush.xpose.msra.mxu0 0.0
  %84 = vmatpush.xpose.msra.mxu0 0.0
  %85 = vmatpush.xpose.msra.mxu0 0.0
  %86 = vmatpush.xpose.msra.mxu0 0.0
  %87 = vmatpush.xpose.msra.mxu0 0.0
  %88 = vmatpush.xpose.msra.mxu0 0.0
  %89 = vmatpush.xpose.msra.mxu0 0.0
  %90 = vmatpush.xpose.msra.mxu0 0.0
  %91 = vmatpush.xpose.msra.mxu0 0.0
  %92 = vmatpush.xpose.msra.mxu0 0.0
  %93 = vmatpush.xpose.msra.mxu0 0.0
  %94 = vmatpush.xpose.msra.mxu0 0.0
  %95 = vmatpush.xpose.msra.mxu0 0.0
  %96 = vmatpush.xpose.msra.mxu0 0.0
  %97 = vmatpush.xpose.msra.mxu0 %v80
  %98 = vmatmul.f32.gmra.mxu0 %v78
  %v99 = vpop.f32.mrf.mxu0
  %v100 = vadd.f32 0.0, %v99
  %101 = vdwg.mxu0
  %v102 = vmul.f32 %v73, 2.828427
  %v103 = vmul.f32 %v100, 2.828427
  %v104 = vsel %vm50, %v102, -inf
  %105 = vmax.xlane.f32.xlu0 %v104
  %v106 = vpop.xlane.xlu0 %105
  %v107 = vsel %vm50, %v103, -inf
  %108 = vmax.xlane.f32.xlu0 %v107
  %v109 = vpop.xlane.xlu0 %108
  %v110 = vsub.f32 %v102, %v106
  %v111 = vsub.f32 %v103, %v109
  %v112 = vmul.f32 %v110, 1.442695
  %v113 = vpow.pop %v112
  %v114 = vmul.f32 %v111, 1.442695
  %v115 = vpow.pop %v114
  %v116 = vsel %vm50, %v113, 0.0
  %117 = vadd.xlane.f32.xlu0 %v116
  %v118 = vpop.xlane.xlu0 %117
  %v119 = vsel %vm50, %v115, 0.0
  %120 = vadd.xlane.f32.xlu0 %v119
  %v121 = vpop.xlane.xlu0 %120
  %v122 = vrcp.pop %v118
  %v123 = vmul.f32 %v118, %v122
  %v124 = vsub.f32 1.0, %v123
  %v125 = vmul.f32 %v122, %v124
  %v126 = vadd.f32 %v122, %v125
  %vm127 = vweird.f32 %v118
  %vm128 = vweird.f32 %v122
  %vm129 = vmor %vm127, %vm128
  %v130 = vsel %vm129, %v122, %v126
  %v131 = vand.u32 2147483647, %v118
  %vm132 = vcmp.eq.f32.partialorder %v131, 8.507059e+37
  %v133 = vand.u32 %v118, 2147483648
  %v134 = vor.u32 1.1754944e-38, %v133
  %v135 = vsel %vm132, %v134, %v130
  %v136 = vmul.f32 %v113, %v135
  %v137 = vrcp.pop %v121
  %v138 = vmul.f32 %v121, %v137
  %v139 = vsub.f32 1.0, %v138
  %v140 = vmul.f32 %v137, %v139
  %v141 = vadd.f32 %v137, %v140
  %vm142 = vweird.f32 %v121
  %vm143 = vweird.f32 %v137
  %vm144 = vmor %vm142, %vm143
  %v145 = vsel %vm144, %v137, %v141
  %v146 = vand.u32 2147483647, %v121
  %vm147 = vcmp.eq.f32.partialorder %v146, 8.507059e+37
  %v148 = vand.u32 %v121, 2147483648
  %v149 = vor.u32 1.1754944e-38, %v148
  %v150 = vsel %vm147, %v149, %v145
  %v151 = vmul.f32 %v115, %v150
  %152 = vrot.lane.b32.xlu0 %v42, 112
  %v153 = vpop.permute.xlu0 %152
  %v156 = vsel %vm50, %v136, 0
  %158 = vmatpush.msra.mxu0 0.0
  %159 = vmatpush.msra.mxu0 0.0
  %160 = vmatpush.msra.mxu0 0.0
  %161 = vmatpush.msra.mxu0 0.0
  %162 = vmatpush.msra.mxu0 0.0
  %163 = vmatpush.msra.mxu0 0.0
  %164 = vmatpush.msra.mxu0 0.0
  %165 = vmatpush.msra.mxu0 0.0
  %166 = vmatpush.msra.mxu0 0.0
  %167 = vmatpush.msra.mxu0 0.0
  %168 = vmatpush.msra.mxu0 0.0
  %169 = vmatpush.msra.mxu0 0.0
  %170 = vmatpush.msra.mxu0 0.0
  %171 = vmatpush.msra.mxu0 0.0
  %172 = vmatpush.msra.mxu0 0.0
  %173 = vmatpush.msra.mxu0 %v153
  %174 = vmatmul.f32.gmra.mxu0 %v156
  %v175 = vpop.f32.mrf.mxu0
  %v176 = vadd.f32 0.0, %v175
  %177 = vdwg.mxu0
  %178 = vrot.lane.b32.xlu0 %v45, 112
  %v179 = vpop.permute.xlu0 %178
  %v182 = vsel %vm50, %v151, 0
  %184 = vmatpush.msra.mxu0 0.0
  %185 = vmatpush.msra.mxu0 0.0
  %186 = vmatpush.msra.mxu0 0.0
  %187 = vmatpush.msra.mxu0 0.0
  %188 = vmatpush.msra.mxu0 0.0
  %189 = vmatpush.msra.mxu0 0.0
  %190 = vmatpush.msra.mxu0 0.0
  %191 = vmatpush.msra.mxu0 0.0
  %192 = vmatpush.msra.mxu0 0.0
  %193 = vmatpush.msra.mxu0 0.0
  %194 = vmatpush.msra.mxu0 0.0
  %195 = vmatpush.msra.mxu0 0.0
  %196 = vmatpush.msra.mxu0 0.0
  %197 = vmatpush.msra.mxu0 0.0
  %198 = vmatpush.msra.mxu0 0.0
  %199 = vmatpush.msra.mxu0 %v179
  %200 = vmatmul.f32.gmra.mxu0 %v182
  %v201 = vpop.f32.mrf.mxu0
  %v202 = vadd.f32 0.0, %v201
  %203 = vdwg.mxu0
  %204 = vst.msk [vmem:[%s2] sm:$0xff] %vm50, %v176
  %205 = vst.msk [vmem:[%s2 + $0x8] sm:$0xff] %vm50, %v202
  // Predicated region
  $region10: #{tpu_custom_call.1} parent=0 // pred_check
    _
  $region11: #{tpu_custom_call.1} parent=0 // pred_check_branch
    %207 = sbr.rel (0) target = $region13
  $region12: #{tpu_custom_call.1} parent=0 // pred_region
    _
  $region13: #{tpu_custom_call.1} parent=0 // pred_fallthru
    _
  // Predicated region
  $region14: #{tpu_custom_call.1} parent=0 // pred_check
    _
  $region15: #{tpu_custom_call.1} parent=0 // pred_check_branch
    %209 = sbr.rel (0) target = $region17
  $region16: #{tpu_custom_call.1} parent=0 // pred_region
    _
  $region17: #{tpu_custom_call.1} parent=0 // pred_fallthru
    _

</llo_original>
